<compile_context>
chip_gen: v6e
topology: v6e:2x2x1
jax: 0.10.0
libtpu: 0.0.40
codegen_flags: <defaults>
</compile_context>

<pallas_src>
import functools

import jax
import jax.numpy as jnp
from jax.experimental import pallas as pl
from jax.experimental.pallas import tpu as pltpu

LANE = 128          # TPU lane width; w3 is padded to a multiple of this for the MXU.
DROP_P = 0.5        # nn.Dropout(p=0.5) in the reference module.


# ---------------------------------------------------------------------------
# Kernels
# ---------------------------------------------------------------------------
def _forward_body(feat_ref, w1_ref, b1_ref, w2_ref, b2_ref, w3_ref, b3_ref,
                  out_ref, *, dropout_bits_fn):
    # feat: [BM, D_in] f32 -> bf16 cast in-kernel (saves a wrapper HBM pass).
    x = feat_ref[...].astype(jnp.bfloat16)

    # Layer 1: Linear + ReLU (bf16 MXU operands, f32 accumulate).
    h1 = jnp.dot(x, w1_ref[...], preferred_element_type=jnp.float32)
    h1 = jnp.maximum(h1 + b1_ref[...], 0.0)

    # Layer 2: Linear + ReLU.
    h2 = jnp.dot(h1.astype(jnp.bfloat16), w2_ref[...],
                 preferred_element_type=jnp.float32)
    h2 = jnp.maximum(h2 + b2_ref[...], 0.0)

    # Dropout(p=0.5): identity in eval mode; inverted dropout in training mode.
    if dropout_bits_fn is not None:
        bits = dropout_bits_fn(h2.shape)                  # uint32
        keep = bits >= jnp.uint32(int(DROP_P * (1 << 32)))  # P(keep) = 1 - p
        h2 = jnp.where(keep, h2 * (1.0 / (1.0 - DROP_P)), 0.0)

    # Layer 3: Linear. w3 is lane-padded to D_out_p for the MXU; only the
    # D_out useful columns are stored (narrow f32 output, minimal writeback).
    y = jnp.dot(h2.astype(jnp.bfloat16), w3_ref[...],
                preferred_element_type=jnp.float32)
    n_out = out_ref.shape[-1]
    out_ref[...] = (y[:, :n_out] + b3_ref[...]).astype(out_ref.dtype)


def _eval_kernel(feat_ref, w1_ref, b1_ref, w2_ref, b2_ref, w3_ref, b3_ref,
                 out_ref):
    _forward_body(feat_ref, w1_ref, b1_ref, w2_ref, b2_ref, w3_ref, b3_ref,
                  out_ref, dropout_bits_fn=None)


def _train_kernel(seed_ref, feat_ref, w1_ref, b1_ref, w2_ref, b2_ref, w3_ref,
                  b3_ref, out_ref):
    # seed_ref: (1,) int32 in SMEM; decorrelate tiles with the grid index.
    def bits_fn(shape):
        pltpu.prng_seed(seed_ref[0] + pl.program_id(0))
        return pltpu.bitcast(pltpu.prng_random_bits(shape), jnp.uint32)

    _forward_body(feat_ref, w1_ref, b1_ref, w2_ref, b2_ref, w3_ref, b3_ref,
                  out_ref, dropout_bits_fn=bits_fn)


# ---------------------------------------------------------------------------
# One-time parameter prep (hoisted out of the per-call path)
# ---------------------------------------------------------------------------
def prepare_params(params):
    """PyTorch [out, in] -> [in, out] transpose, bf16 cast for the MXU, and
    zero-padding of w3 to a multiple of 128 columns (MXU lane-dense operand).
    b3 stays unpadded: the kernel only stores the D_out useful columns."""
    H = params["w1"].shape[0]
    D_out = params["w3"].shape[0]
    D_out_p = pl.cdiv(D_out, LANE) * LANE

    w3t = jnp.zeros((H, D_out_p), jnp.bfloat16)
    w3t = w3t.at[:, :D_out].set(params["w3"].T.astype(jnp.bfloat16))

    return dict(
        w1t=params["w1"].T.astype(jnp.bfloat16),            # [D_in, H]
        b1=params["b1"].reshape(1, -1).astype(jnp.float32),  # [1, H]
        w2t=params["w2"].T.astype(jnp.bfloat16),            # [H, H]
        b2=params["b2"].reshape(1, -1).astype(jnp.float32),  # [1, H]
        w3t=w3t,                                             # [H, D_out_p]
        b3=params["b3"].reshape(1, -1).astype(jnp.float32),  # [1, D_out]
    )


# ---------------------------------------------------------------------------
# Forward wrapper
# ---------------------------------------------------------------------------
@functools.partial(jax.jit, static_argnames=("bm", "training"))
def encoder_trans_forward(feat, prepped, *, bm=512, training=False, rng_seed=0):
    """feat: [B, D_in] f32. Returns [B, D_out] f32.

    bm: batch tile. For large B keep it 512-1024 (~85% of HBM roofline); on
    v7x size it so ceil(B/bm) >= 8-16 when using megacore ("parallel")."""
    B, D_in = feat.shape
    H = prepped["w1t"].shape[1]
    D_out = prepped["b3"].shape[1]
    D_out_p = prepped["w3t"].shape[1]

    # Batch tiling: a single full-size tile when B <= bm (no padding, grid=1);
    # otherwise bm rows per tile (rounded to a sublane multiple of 8).
    if B <= bm:
        bm_eff = B
    else:
        bm_eff = max(8, (bm // 8) * 8)
    B_pad = pl.cdiv(B, bm_eff) * bm_eff
    x = feat
    if B_pad != B:
        # Padded rows produce garbage (bias+ReLU on zeros) and are sliced away
        # below; never consume the padded buffer directly.
        x = jnp.pad(x, ((0, B_pad - B), (0, 0)))
    grid = (B_pad // bm_eff,)

    # --- VMEM budget (f32 input tiles, resident bf16 weights, f32 activations)
    weight_bytes = 2 * (D_in * H + H * H + H * D_out_p)          # bf16
    bias_bytes = 4 * (2 * H + D_out)                              # f32
    io_tile_bytes = 2 * bm_eff * (D_in * 4 + D_out * 4)           # double-buffered in/out
    act_bytes = bm_eff * (D_in * 2 + 2 * H * 4 + 2 * H * 2 + D_out_p * 4)
    vmem_bytes = int(io_tile_bytes + 2 * weight_bytes + 2 * bias_bytes
                     + act_bytes + (4 << 20))
    vmem_bytes = min(vmem_bytes, 100 << 20)

    cost = pl.CostEstimate(
        flops=2 * B_pad * (D_in * H + H * H + H * D_out_p),
        transcendentals=0,
        bytes_accessed=int(B_pad * D_in * 4 + weight_bytes + bias_bytes
                           + B_pad * D_out * 4),
    )

    const = lambda shape: pl.BlockSpec(shape, lambda i: (0, 0))
    in_specs = [
        pl.BlockSpec((bm_eff, D_in), lambda i: (i, 0)),   # pipelined f32 batch tiles
        const((D_in, H)), const((1, H)),                  # resident weights/biases
        const((H, H)), const((1, H)),
        const((H, D_out_p)), const((1, D_out)),
    ]
    args = [x, prepped["w1t"], prepped["b1"], prepped["w2t"], prepped["b2"],
            prepped["w3t"], prepped["b3"]]

    if training:
        kernel = _train_kernel
        in_specs = [pl.BlockSpec(memory_space=pltpu.MemorySpace.SMEM)] + in_specs
        args = [jnp.asarray([rng_seed], dtype=jnp.int32)] + args
    else:
        kernel = _eval_kernel

    out = pl.pallas_call(
        kernel,
        out_shape=jax.ShapeDtypeStruct((B_pad, D_out), jnp.float32),
        grid=grid,
        in_specs=in_specs,
        out_specs=pl.BlockSpec((bm_eff, D_out), lambda i: (i, 0)),
        compiler_params=pltpu.CompilerParams(
            dimension_semantics=("parallel",),     # megacore on v7x; no-op elsewhere
            vmem_limit_bytes=vmem_bytes,
        ),
        cost_estimate=cost,
    )(*args)

    return out[:B] if B_pad != B else out


# ---------------------------------------------------------------------------
# Init + reference
# ---------------------------------------------------------------------------
def init_params(key, input_dim, hidden, out_dim):
    """Deterministic init mimicking nn.Linear default (uniform +/- 1/sqrt(fan_in))."""
    ks = jax.random.split(key, 6)

    def lin(kw, kb, fan_in, fan_out):
        bound = 1.0 / jnp.sqrt(jnp.float32(fan_in))
        w = jax.random.uniform(kw, (fan_out, fan_in), jnp.float32, -bound, bound)
        b = jax.random.uniform(kb, (fan_out,), jnp.float32, -bound, bound)
        return w, b

    w1, b1 = lin(ks[0], ks[1], input_dim, hidden)
    w2, b2 = lin(ks[2], ks[3], hidden, hidden)
    w3, b3 = lin(ks[4], ks[5], hidden, out_dim)
    return {"w1": w1, "b1": b1, "w2": w2, "b2": b2, "w3": w3, "b3": b3}


def _reference_bf16(feat, p):
    """f32 reference with operands rounded to bf16 (matches the kernel's MXU
    numerics: bf16 multiply, f32 accumulate); eval-mode dropout (identity)."""
    r = lambda a: a.astype(jnp.bfloat16).astype(jnp.float32)
    h1 = jnp.maximum(r(feat) @ r(p["w1"]).T + p["b1"], 0.0)
    h2 = jnp.maximum(r(h1) @ r(p["w2"]).T + p["b2"], 0.0)
    return r(h2) @ r(p["w3"]).T + p["b3"]


if __name__ == "__main__":
    # Small shapes consistent with EncoderTrans(input_dim, out_dim, hidden).
    B, INPUT_DIM, HIDDEN, OUT_DIM = 200, 256, 128, 8

    key = jax.random.PRNGKey(0)
    k_feat, k_params = jax.random.split(key)
    feat = jax.random.normal(k_feat, (B, INPUT_DIM), dtype=jnp.float32)
    params = init_params(k_params, INPUT_DIM, HIDDEN, OUT_DIM)
    prepped = prepare_params(params)
    ref = _reference_bf16(feat, params)

    # Path 1: default bm (>= B) -> single full-size tile, grid=(1,), no padding.
    out1 = jax.block_until_ready(encoder_trans_forward(feat, prepped))
    assert out1.shape == (B, OUT_DIM), f"bad shape {out1.shape}"
    assert jnp.allclose(out1, ref, atol=2e-2, rtol=2e-2), "mismatch (single tile)"

    # Path 2: small tile -> multi-step pipelined grid=(4,) with batch padding.
    out2 = jax.block_until_ready(encoder_trans_forward(feat, prepped, bm=64))
    assert out2.shape == (B, OUT_DIM), f"bad shape {out2.shape}"
    assert jnp.allclose(out2, ref, atol=2e-2, rtol=2e-2), "mismatch (tiled/padded)"

    print("KERNEL_OK")
</pallas_src>

<mosaic_0001>
module attributes {stable_mosaic.version = 11 : i64} {
  func.func @_eval_kernel(%arg0: i32, %arg1: memref<200x256xf32, #tpu.memory_space<vmem>>, %arg2: memref<256x128xbf16, #tpu.memory_space<vmem>>, %arg3: memref<1x128xf32, #tpu.memory_space<vmem>>, %arg4: memref<128x128xbf16, #tpu.memory_space<vmem>>, %arg5: memref<1x128xf32, #tpu.memory_space<vmem>>, %arg6: memref<128x128xbf16, #tpu.memory_space<vmem>>, %arg7: memref<1x8xf32, #tpu.memory_space<vmem>>, %arg8: memref<200x8xf32, #tpu.memory_space<vmem>>) attributes {dimension_semantics = [#tpu.dimension_semantics<parallel>], iteration_bounds = array<i64: 1>, scalar_prefetch = 0 : i64, scratch_operands = 0 : i64, tpu.core_type = #tpu.core_type<tc>, window_params = [{transform_indices = @transform_0, window_bounds = array<i64: 200, 256>}, {pipeline_mode = #tpu.pipeline_mode<synchronous>, transform_indices = @transform_1, window_bounds = array<i64: 256, 128>}, {pipeline_mode = #tpu.pipeline_mode<synchronous>, transform_indices = @transform_2, window_bounds = array<i64: 1, 128>}, {pipeline_mode = #tpu.pipeline_mode<synchronous>, transform_indices = @transform_3, window_bounds = array<i64: 128, 128>}, {pipeline_mode = #tpu.pipeline_mode<synchronous>, transform_indices = @transform_4, window_bounds = array<i64: 1, 128>}, {pipeline_mode = #tpu.pipeline_mode<synchronous>, transform_indices = @transform_5, window_bounds = array<i64: 128, 128>}, {pipeline_mode = #tpu.pipeline_mode<synchronous>, transform_indices = @transform_6, window_bounds = array<i64: 1, 8>}, {transform_indices = @transform_7, window_bounds = array<i64: 200, 8>}]} {
    %c0 = arith.constant 0 : index
    %c0_0 = arith.constant 0 : index
    %0 = vector.load %arg1[%c0, %c0_0] : memref<200x256xf32, #tpu.memory_space<vmem>>, vector<200x256xf32>
    %1 = arith.truncf %0 : vector<200x256xf32> to vector<200x256xbf16>
    %c0_1 = arith.constant 0 : index
    %c0_2 = arith.constant 0 : index
    %2 = vector.load %arg2[%c0_1, %c0_2] : memref<256x128xbf16, #tpu.memory_space<vmem>>, vector<256x128xbf16>
    %cst = arith.constant dense<0.000000e+00> : vector<200x128xf32>
    %3 = tpu.matmul %1, %2, %cst {dimension_numbers = #tpu.dot_dimension_numbers<[1], [0], [0], [1], [0, 0, 1, 1], [], []>} : vector<200x256xbf16>, vector<256x128xbf16>, vector<200x128xf32> -> vector<200x128xf32>
    %c0_3 = arith.constant 0 : index
    %c0_4 = arith.constant 0 : index
    %4 = vector.load %arg3[%c0_3, %c0_4] : memref<1x128xf32, #tpu.memory_space<vmem>>, vector<1x128xf32>
    %5 = vector.broadcast %4 : vector<1x128xf32> to vector<200x128xf32>
    %6 = arith.addf %3, %5 : vector<200x128xf32>
    %cst_5 = arith.constant 0.000000e+00 : f32
    %7 = vector.broadcast %cst_5 : f32 to vector<200x128xf32>
    %8 = arith.maximumf %6, %7 : vector<200x128xf32>
    %9 = arith.truncf %8 : vector<200x128xf32> to vector<200x128xbf16>
    %c0_6 = arith.constant 0 : index
    %c0_7 = arith.constant 0 : index
    %10 = vector.load %arg4[%c0_6, %c0_7] : memref<128x128xbf16, #tpu.memory_space<vmem>>, vector<128x128xbf16>
    %cst_8 = arith.constant dense<0.000000e+00> : vector<200x128xf32>
    %11 = tpu.matmul %9, %10, %cst_8 {dimension_numbers = #tpu.dot_dimension_numbers<[1], [0], [0], [1], [0, 0, 1, 1], [], []>} : vector<200x128xbf16>, vector<128x128xbf16>, vector<200x128xf32> -> vector<200x128xf32>
    %c0_9 = arith.constant 0 : index
    %c0_10 = arith.constant 0 : index
    %12 = vector.load %arg5[%c0_9, %c0_10] : memref<1x128xf32, #tpu.memory_space<vmem>>, vector<1x128xf32>
    %13 = vector.broadcast %12 : vector<1x128xf32> to vector<200x128xf32>
    %14 = arith.addf %11, %13 : vector<200x128xf32>
    %cst_11 = arith.constant 0.000000e+00 : f32
    %15 = vector.broadcast %cst_11 : f32 to vector<200x128xf32>
    %16 = arith.maximumf %14, %15 : vector<200x128xf32>
    %17 = arith.truncf %16 : vector<200x128xf32> to vector<200x128xbf16>
    %c0_12 = arith.constant 0 : index
    %c0_13 = arith.constant 0 : index
    %18 = vector.load %arg6[%c0_12, %c0_13] : memref<128x128xbf16, #tpu.memory_space<vmem>>, vector<128x128xbf16>
    %cst_14 = arith.constant dense<0.000000e+00> : vector<200x128xf32>
    %19 = tpu.matmul %17, %18, %cst_14 {dimension_numbers = #tpu.dot_dimension_numbers<[1], [0], [0], [1], [0, 0, 1, 1], [], []>} : vector<200x128xbf16>, vector<128x128xbf16>, vector<200x128xf32> -> vector<200x128xf32>
    %20 = vector.extract_strided_slice %19 {offsets = [0, 0], sizes = [200, 8], strides = [1, 1]} : vector<200x128xf32> to vector<200x8xf32>
    %c0_15 = arith.constant 0 : index
    %c0_16 = arith.constant 0 : index
    %21 = vector.load %arg7[%c0_15, %c0_16] : memref<1x8xf32, #tpu.memory_space<vmem>>, vector<1x8xf32>
    %22 = vector.broadcast %21 : vector<1x8xf32> to vector<200x8xf32>
    %23 = arith.addf %20, %22 : vector<200x8xf32>
    %c0_17 = arith.constant 0 : index
    %c0_18 = arith.constant 0 : index
    %24 = vector.load %arg8[%c0_17, %c0_18] : memref<200x8xf32, #tpu.memory_space<vmem>>, vector<200x8xf32>
    tpu.vector_store %arg8[%c0_17, %c0_18], %23 {strides = array<i32>} : memref<200x8xf32, #tpu.memory_space<vmem>>, vector<200x8xf32>,
    return
  }
  func.func @transform_0(%arg0: i32) -> (i32, i32) {
    %c0_i32 = arith.constant 0 : i32
    %c0_i32_0 = arith.constant 0 : i32
    return %arg0, %c0_i32 : i32, i32
  }
  func.func @transform_1(%arg0: i32) -> (i32, i32) {
    %c0_i32 = arith.constant 0 : i32
    %c0_i32_0 = arith.constant 0 : i32
    %c0_i32_1 = arith.constant 0 : i32
    return %c0_i32, %c0_i32_0 : i32, i32
  }
  func.func @transform_2(%arg0: i32) -> (i32, i32) {
    %c0_i32 = arith.constant 0 : i32
    %c0_i32_0 = arith.constant 0 : i32
    %c0_i32_1 = arith.constant 0 : i32
    return %c0_i32, %c0_i32_0 : i32, i32
  }
  func.func @transform_3(%arg0: i32) -> (i32, i32) {
    %c0_i32 = arith.constant 0 : i32
    %c0_i32_0 = arith.constant 0 : i32
    %c0_i32_1 = arith.constant 0 : i32
    return %c0_i32, %c0_i32_0 : i32, i32
  }
  func.func @transform_4(%arg0: i32) -> (i32, i32) {
    %c0_i32 = arith.constant 0 : i32
    %c0_i32_0 = arith.constant 0 : i32
    %c0_i32_1 = arith.constant 0 : i32
    return %c0_i32, %c0_i32_0 : i32, i32
  }
  func.func @transform_5(%arg0: i32) -> (i32, i32) {
    %c0_i32 = arith.constant 0 : i32
    %c0_i32_0 = arith.constant 0 : i32
    %c0_i32_1 = arith.constant 0 : i32
    return %c0_i32, %c0_i32_0 : i32, i32
  }
  func.func @transform_6(%arg0: i32) -> (i32, i32) {
    %c0_i32 = arith.constant 0 : i32
    %c0_i32_0 = arith.constant 0 : i32
    %c0_i32_1 = arith.constant 0 : i32
    return %c0_i32, %c0_i32_0 : i32, i32
  }
  func.func @transform_7(%arg0: i32) -> (i32, i32) {
    %c0_i32 = arith.constant 0 : i32
    %c0_i32_0 = arith.constant 0 : i32
    return %arg0, %c0_i32 : i32, i32
  }
}

</mosaic_0001>

<llo_original>
// kernel: encoder_trans_forward.1
$region0: #{encoder_trans_forward.1}
  #allocation0 [shape = 'u32[]', space=smem, size = 0x4, offset = 0x4, fixed_abs, tag = 'smem constant byte address 0x4 - core index']
  #allocation1 [shape = 'u32[144,128]{1,0:T(1,128)}', space=vmem, size = 0x12000, scoped, tag = 'internal scratch']
  %s0 = inlined_call_operand.hbm [shape: f32[200,256], index: 0, kind: input, shape index: {}]
  %s1 = inlined_call_operand.hbm [shape: bf16[256,128], index: 1, kind: input, shape index: {}]
  %s2 = inlined_call_operand.vmem [shape: f32[1,128], index: 2, kind: input, shape index: {}]
  %s3 = inlined_call_operand.hbm [shape: bf16[128,128], index: 3, kind: input, shape index: {}]
  %s4 = inlined_call_operand.vmem [shape: f32[1,128], index: 4, kind: input, shape index: {}]
  %s5 = inlined_call_operand.hbm [shape: bf16[128,128], index: 5, kind: input, shape index: {}]
  %s6 = inlined_call_operand.vmem [shape: f32[1,8], index: 6, kind: input, shape index: {}]
  %s7 = inlined_call_operand.vmem [shape: f32[200,8], index: 7, kind: output, shape index: {}]
  %s8 = sld [smem:[#allocation0]]
  $region54: #{encoder_trans_forward.1} parent=0
    _
  %s10 = ssub.s32 1, %s8
  %s11 = scalar_select 0, %s10, %s8
  $region1: #{encoder_trans_forward.1} parent=0
    #allocation2 [shape = 'u8[204800]{0}', space=vmem, size = 0x32000, scoped, tag = 'input window, operand 0, single buffered']
    #allocation3 [shape = 's32[1]{0}', space=sflag, size = 0x4, scoped, tag = 'scoped memory for encoder_trans_forward.1']
    #allocation4 [shape = 'u8[65536]{0}', space=vmem, size = 0x10000, scoped, tag = 'input window, operand 1, single buffered']
    #allocation5 [shape = 's32[1]{0}', space=sflag, size = 0x4, scoped, tag = 'scoped memory for encoder_trans_forward.1']
    #allocation6 [shape = 'u8[32768]{0}', space=vmem, size = 0x8000, scoped, tag = 'input window, operand 3, single buffered']
    #allocation7 [shape = 'u8[32768]{0}', space=vmem, size = 0x8000, scoped, tag = 'input window, operand 5, single buffered']
    #allocation8 [shape = 's32[1]{0}', space=sflag, size = 0x4, scoped, tag = 'scoped memory for encoder_trans_forward.1']
    %12 = vsyncpa [#allocation3], 0
    %13 = vsyncpa [#allocation5], 0
    %14 = vsyncpa [#allocation8], 0
    // Predicated region
    $region2: #{encoder_trans_forward.1} parent=1 // pred_check
      _
    $region3: #{encoder_trans_forward.1} parent=1 // pred_check_branch
      %16 = sbr.rel (0) target = $region5
    $region4: #{encoder_trans_forward.1} parent=1 // pred_region
      %s18 = ssub.s32 6400, 6400
      %19 = vsyncadd [#allocation3], %s18
      %s20 = sshll.u32 [#allocation2], 4
      %s21 = int_to_ptr.vmem [resolvable:$true] %s20
      %26 = dma.hbm_to_vmem [thread:$0]  %s0, 6400, %s21, [#allocation3], 256, 256, 16
    $region5: #{encoder_trans_forward.1} parent=1 // pred_fallthru
      _
    // Predicated region
    $region6: #{encoder_trans_forward.1} parent=1 // pred_check
      _
    $region7: #{encoder_trans_forward.1} parent=1 // pred_check_branch
      %28 = sbr.rel (0) target = $region9
    $region8: #{encoder_trans_forward.1} parent=1 // pred_region
      %s30 = ssub.s32 2048, 2048
      %31 = vsyncadd [#allocation5], %s30
      %s32 = sshll.u32 [#allocation4], 4
      %s33 = int_to_ptr.vmem [resolvable:$true] %s32
      %38 = dma.hbm_to_vmem [thread:$0]  %s1, 2048, %s33, [#allocation5], 64, 64, 4
    $region9: #{encoder_trans_forward.1} parent=1 // pred_fallthru
      _
    // Predicated region
    $region10: #{encoder_trans_forward.1} parent=1 // pred_check
      _
    $region11: #{encoder_trans_forward.1} parent=1 // pred_check_branch
      %40 = sbr.rel (0) target = $region13
    $region12: #{encoder_trans_forward.1} parent=1 // pred_region
      _
    $region13: #{encoder_trans_forward.1} parent=1 // pred_fallthru
      _
    // Predicated region
    $region14: #{encoder_trans_forward.1} parent=1 // pred_check
      _
    $region15: #{encoder_trans_forward.1} parent=1 // pred_check_branch
      %42 = sbr.rel (0) target = $region17
    $region16: #{encoder_trans_forward.1} parent=1 // pred_region
      %s44 = ssub.s32 1024, 1024
      %45 = vsyncadd [#allocation5], %s44
      %s46 = sshll.u32 [#allocation6], 4
      %s47 = int_to_ptr.vmem [resolvable:$true] %s46
      %52 = dma.hbm_to_vmem [thread:$0]  %s3, 1024, %s47, [#allocation5], 64, 64, 4
    $region17: #{encoder_trans_forward.1} parent=1 // pred_fallthru
      _
    // Predicated region
    $region18: #{encoder_trans_forward.1} parent=1 // pred_check
      _
    $region19: #{encoder_trans_forward.1} parent=1 // pred_check_branch
      %54 = sbr.rel (0) target = $region21
    $region20: #{encoder_trans_forward.1} parent=1 // pred_region
      _
    $region21: #{encoder_trans_forward.1} parent=1 // pred_fallthru
      _
    // Predicated region
    $region22: #{encoder_trans_forward.1} parent=1 // pred_check
      _
    $region23: #{encoder_trans_forward.1} parent=1 // pred_check_branch
      %56 = sbr.rel (0) target = $region25
    $region24: #{encoder_trans_forward.1} parent=1 // pred_region
      %s58 = ssub.s32 1024, 1024
      %59 = vsyncadd [#allocation8], %s58
      %s60 = sshll.u32 [#allocation7], 4
      %s61 = int_to_ptr.vmem [resolvable:$true] %s60
      %66 = dma.hbm_to_vmem [thread:$0]  %s5, 1024, %s61, [#allocation8], 64, 64, 4
    $region25: #{encoder_trans_forward.1} parent=1 // pred_fallthru
      _
    // Predicated region
    $region26: #{encoder_trans_forward.1} parent=1 // pred_check
      _
    $region27: #{encoder_trans_forward.1} parent=1 // pred_check_branch
      %68 = sbr.rel (0) target = $region29
    $region28: #{encoder_trans_forward.1} parent=1 // pred_region
      _
    $region29: #{encoder_trans_forward.1} parent=1 // pred_fallthru
      _
    // Predicated region
    $region30: #{encoder_trans_forward.1} parent=1 // pred_check
      _
    $region31: #{encoder_trans_forward.1} parent=1 // pred_check_branch
      %70 = sbr.rel (0) target = $region33
    $region32: #{encoder_trans_forward.1} parent=1 // pred_region
      %71 = dma.done [#allocation3], 6400
    $region33: #{encoder_trans_forward.1} parent=1 // pred_fallthru
      _
    // Predicated region
    $region34: #{encoder_trans_forward.1} parent=1 // pred_check
      _
    $region35: #{encoder_trans_forward.1} parent=1 // pred_check_branch
      %73 = sbr.rel (0) target = $region37
    $region36: #{encoder_trans_forward.1} parent=1 // pred_region
      %74 = dma.done [#allocation5], 2048
    $region37: #{encoder_trans_forward.1} parent=1 // pred_fallthru
      _
    // Predicated region
    $region38: #{encoder_trans_forward.1} parent=1 // pred_check
      _
    $region39: #{encoder_trans_forward.1} parent=1 // pred_check_branch
      %76 = sbr.rel (0) target = $region41
    $region40: #{encoder_trans_forward.1} parent=1 // pred_region
      %77 = dma.done [#allocation5], 1024
    $region41: #{encoder_trans_forward.1} parent=1 // pred_fallthru
      _
    // Predicated region
    $region42: #{encoder_trans_forward.1} parent=1 // pred_check
      _
    $region43: #{encoder_trans_forward.1} parent=1 // pred_check_branch
      %79 = sbr.rel (0) target = $region45
    $region44: #{encoder_trans_forward.1} parent=1 // pred_region
      %80 = dma.done [#allocation8], 1024
    $region45: #{encoder_trans_forward.1} parent=1 // pred_fallthru
      _
    %v82 = vld [vmem:[#allocation2] sm:$0xff]
    %v83 = vld [vmem:[#allocation2 + $0x8] sm:$0xff]
    %v84 = vld [vmem:[#allocation2 + $0x10] sm:$0xff]
    %v85 = vld [vmem:[#allocation2 + $0x18] sm:$0xff]
    %v86 = vld [vmem:[#allocation2 + $0x20] sm:$0xff]
    %v87 = vld [vmem:[#allocation2 + $0x28] sm:$0xff]
    %v88 = vld [vmem:[#allocation2 + $0x30] sm:$0xff]
    %v89 = vld [vmem:[#allocation2 + $0x38] sm:$0xff]
    %v90 = vld [vmem:[#allocation2 + $0x40] sm:$0xff]
    %v91 = vld [vmem:[#allocation2 + $0x48] sm:$0xff]
    %v92 = vld [vmem:[#allocation2 + $0x50] sm:$0xff]
    %v93 = vld [vmem:[#allocation2 + $0x58] sm:$0xff]
    %v94 = vld [vmem:[#allocation2 + $0x60] sm:$0xff]
    %v95 = vld [vmem:[#allocation2 + $0x68] sm:$0xff]
    %v96 = vld [vmem:[#allocation2 + $0x70] sm:$0xff]
    %v97 = vld [vmem:[#allocation2 + $0x78] sm:$0xff]
    %v98 = vld [vmem:[#allocation2 + $0x80] sm:$0xff]
    %v99 = vld [vmem:[#allocation2 + $0x88] sm:$0xff]
    %v100 = vld [vmem:[#allocation2 + $0x90] sm:$0xff]
    %v101 = vld [vmem:[#allocation2 + $0x98] sm:$0xff]
    %v102 = vld [vmem:[#allocation2 + $0xa0] sm:$0xff]
    %v103 = vld [vmem:[#allocation2 + $0xa8] sm:$0xff]
    %v104 = vld [vmem:[#allocation2 + $0xb0] sm:$0xff]
    %v105 = vld [vmem:[#allocation2 + $0xb8] sm:$0xff]
    %v106 = vld [vmem:[#allocation2 + $0xc0] sm:$0xff]
    %v107 = vld [vmem:[#allocation2 + $0xc8] sm:$0xff]
    %v108 = vld [vmem:[#allocation2 + $0xd0] sm:$0xff]
    %v109 = vld [vmem:[#allocation2 + $0xd8] sm:$0xff]
    %v110 = vld [vmem:[#allocation2 + $0xe0] sm:$0xff]
    %v111 = vld [vmem:[#allocation2 + $0xe8] sm:$0xff]
    %v112 = vld [vmem:[#allocation2 + $0xf0] sm:$0xff]
    %v113 = vld [vmem:[#allocation2 + $0xf8] sm:$0xff]
    %v114 = vld [vmem:[#allocation2 + $0x100] sm:$0xff]
    %v115 = vld [vmem:[#allocation2 + $0x108] sm:$0xff]
    %v116 = vld [vmem:[#allocation2 + $0x110] sm:$0xff]
    %v117 = vld [vmem:[#allocation2 + $0x118] sm:$0xff]
    %v118 = vld [vmem:[#allocation2 + $0x120] sm:$0xff]
    %v119 = vld [vmem:[#allocation2 + $0x128] sm:$0xff]
    %v120 = vld [vmem:[#allocation2 + $0x130] sm:$0xff]
    %v121 = vld [vmem:[#allocation2 + $0x138] sm:$0xff]
    %v122 = vld [vmem:[#allocation2 + $0x140] sm:$0xff]
    %v123 = vld [vmem:[#allocation2 + $0x148] sm:$0xff]
    %v124 = vld [vmem:[#allocation2 + $0x150] sm:$0xff]
    %v125 = vld [vmem:[#allocation2 + $0x158] sm:$0xff]
    %v126 = vld [vmem:[#allocation2 + $0x160] sm:$0xff]
    %v127 = vld [vmem:[#allocation2 + $0x168] sm:$0xff]
    %v128 = vld [vmem:[#allocation2 + $0x170] sm:$0xff]
    %v129 = vld [vmem:[#allocation2 + $0x178] sm:$0xff]
    %v130 = vld [vmem:[#allocation2 + $0x180] sm:$0xff]
    %v131 = vld [vmem:[#allocation2 + $0x188] sm:$0xff]
    %v132 = vpack.c.bf16 %v84, %v82
    %v133 = vpack.c.bf16 %v85, %v83
    %v134 = vpack.c.bf16 %v88, %v86
    %v135 = vpack.c.bf16 %v89, %v87
    %v136 = vpack.c.bf16 %v92, %v90
    %v137 = vpack.c.bf16 %v93, %v91
    %v138 = vpack.c.bf16 %v96, %v94
    %v139 = vpack.c.bf16 %v97, %v95
    %v140 = vpack.c.bf16 %v100, %v98
    %v141 = vpack.c.bf16 %v101, %v99
    %v142 = vpack.c.bf16 %v104, %v102
    %v143 = vpack.c.bf16 %v105, %v103
    %v144 = vpack.c.bf16 %v108, %v106
    %v145 = vpack.c.bf16 %v109, %v107
    %v146 = vpack.c.bf16 %v112, %v110
    %v147 = vpack.c.bf16 %v113, %v111
    %v148 = vpack.c.bf16 %v116, %v114
    %v149 = vpack.c.bf16 %v117, %v115
    %v150 = vpack.c.bf16 %v120, %v118
    %v151 = vpack.c.bf16 %v121, %v119
    %v152 = vpack.c.bf16 %v124, %v122
    %v153 = vpack.c.bf16 %v125, %v123
    %v154 = vpack.c.bf16 %v128, %v126
    %v155 = vpack.c.bf16 %v129, %v127
    %v156 = vpack.c.bf16 %v130, %v130
    %v157 = vpack.c.bf16 %v131, %v131
    %v158 = vld [vmem:[#allocation4] sm:$0xf]
    %v159 = vld [vmem:[#allocation4 + $0x4] sm:$0xf]
    %v160 = vld [vmem:[#allocation4 + $0x8] sm:$0xf]
    %v161 = vld [vmem:[#allocation4 + $0xc] sm:$0xf]
    %v162 = vld [vmem:[#allocation4 + $0x10] sm:$0xf]
    %v163 = vld [vmem:[#allocation4 + $0x14] sm:$0xf]
    %v164 = vld [vmem:[#allocation4 + $0x18] sm:$0xf]
    %v165 = vld [vmem:[#allocation4 + $0x1c] sm:$0xf]
    %v166 = vld [vmem:[#allocation4 + $0x20] sm:$0xf]
    %v167 = vld [vmem:[#allocation4 + $0x24] sm:$0xf]
    %v168 = vld [vmem:[#allocation4 + $0x28] sm:$0xf]
    %v169 = vld [vmem:[#allocation4 + $0x2c] sm:$0xf]
    %v170 = vld [vmem:[#allocation4 + $0x30] sm:$0xf]
    %v171 = vld [vmem:[#allocation4 + $0x34] sm:$0xf]
    %v172 = vld [vmem:[#allocation4 + $0x38] sm:$0xf]
    %v173 = vld [vmem:[#allocation4 + $0x3c] sm:$0xf]
    %v174 = vld [vmem:[#allocation4 + $0x40] sm:$0xf]
    %v175 = vld [vmem:[#allocation4 + $0x44] sm:$0xf]
    %v176 = vld [vmem:[#allocation4 + $0x48] sm:$0xf]
    %v177 = vld [vmem:[#allocation4 + $0x4c] sm:$0xf]
    %v178 = vld [vmem:[#allocation4 + $0x50] sm:$0xf]
    %v179 = vld [vmem:[#allocation4 + $0x54] sm:$0xf]
    %v180 = vld [vmem:[#allocation4 + $0x58] sm:$0xf]
    %v181 = vld [vmem:[#allocation4 + $0x5c] sm:$0xf]
    %v182 = vld [vmem:[#allocation4 + $0x60] sm:$0xf]
    %v183 = vld [vmem:[#allocation4 + $0x64] sm:$0xf]
    %v184 = vld [vmem:[#allocation4 + $0x68] sm:$0xf]
    %v185 = vld [vmem:[#allocation4 + $0x6c] sm:$0xf]
    %v186 = vld [vmem:[#allocation4 + $0x70] sm:$0xf]
    %v187 = vld [vmem:[#allocation4 + $0x74] sm:$0xf]
    %v188 = vld [vmem:[#allocation4 + $0x78] sm:$0xf]
    %v189 = vld [vmem:[#allocation4 + $0x7c] sm:$0xf]
    %v190 = vld [vmem:[%s2] sm:$0x1]
    %v192 = vlaneseq
    %v193 = vshrl.u32 %v192, 7
    %v194 = vsub.s32 0, %v193
    %v195 = vrot.slane %v190, %v194
    %v229 = vunpack.c.l.b16 %v158
    %v230 = vunpack.c.l.b16 %v159
    %v231 = vunpack.c.l.b16 %v160
    %v232 = vunpack.c.l.b16 %v161
    %v233 = vunpack.c.l.b16 %v162
    %v234 = vunpack.c.l.b16 %v163
    %v235 = vunpack.c.l.b16 %v164
    %v236 = vunpack.c.l.b16 %v165
    %v237 = vunpack.c.l.b16 %v166
    %v238 = vunpack.c.l.b16 %v167
    %v239 = vunpack.c.l.b16 %v168
    %v240 = vunpack.c.l.b16 %v169
    %v241 = vunpack.c.l.b16 %v170
    %v242 = vunpack.c.l.b16 %v171
    %v243 = vunpack.c.l.b16 %v172
    %v244 = vunpack.c.l.b16 %v173
    %v245 = vunpack.c.l.b16 %v174
    %v246 = vunpack.c.l.b16 %v175
    %v247 = vunpack.c.l.b16 %v176
    %v248 = vunpack.c.l.b16 %v177
    %v249 = vunpack.c.l.b16 %v178
    %v250 = vunpack.c.l.b16 %v179
    %v251 = vunpack.c.l.b16 %v180
    %v252 = vunpack.c.l.b16 %v181
    %v253 = vunpack.c.l.b16 %v182
    %v254 = vunpack.c.l.b16 %v183
    %v255 = vunpack.c.l.b16 %v184
    %v256 = vunpack.c.l.b16 %v185
    %v257 = vunpack.c.l.b16 %v186
    %v258 = vunpack.c.l.b16 %v187
    %v259 = vunpack.c.l.b16 %v188
    %v260 = vunpack.c.l.b16 %v189
    %v261 = vpack.c.b16 %v230, %v229
    %v262 = vpack.c.b16 %v232, %v231
    %v263 = vpack.c.b16 %v234, %v233
    %v264 = vpack.c.b16 %v236, %v235
    %v265 = vpack.c.b16 %v238, %v237
    %v266 = vpack.c.b16 %v240, %v239
    %v267 = vpack.c.b16 %v242, %v241
    %v268 = vpack.c.b16 %v244, %v243
    %v269 = vpack.c.b16 %v246, %v245
    %v270 = vpack.c.b16 %v248, %v247
    %v271 = vpack.c.b16 %v250, %v249
    %v272 = vpack.c.b16 %v252, %v251
    %v273 = vpack.c.b16 %v254, %v253
    %v274 = vpack.c.b16 %v256, %v255
    %v275 = vpack.c.b16 %v258, %v257
    %v276 = vpack.c.b16 %v260, %v259
    %293 = vmatprep.subr.bf16.mxu0 0
    %294 = vmatpush1.bf16.msra.mxu0 %v268
    %295 = vmatprep.subr.bf16.mxu0 0
    %296 = vmatpush1.bf16.msra.mxu0 %v267
    %297 = vmatprep.subr.bf16.mxu0 0
    %298 = vmatpush1.bf16.msra.mxu0 %v266
    %299 = vmatprep.subr.bf16.mxu0 0
    %300 = vmatpush1.bf16.msra.mxu0 %v265
    %301 = vmatprep.subr.bf16.mxu0 0
    %302 = vmatpush1.bf16.msra.mxu0 %v264
    %303 = vmatprep.subr.bf16.mxu0 0
    %304 = vmatpush1.bf16.msra.mxu0 %v263
    %305 = vmatprep.subr.bf16.mxu0 0
    %306 = vmatpush1.bf16.msra.mxu0 %v262
    %307 = vmatprep.subr.bf16.mxu0 0
    %308 = vmatpush1.bf16.msra.mxu0 %v261
    %309 = vmatprep.subr.bf16.mxu0 0
    %310 = vmatpush2.bf16.msra.mxu0 %v276
    %311 = vmatprep.subr.bf16.mxu0 0
    %312 = vmatpush2.bf16.msra.mxu0 %v275
    %313 = vmatprep.subr.bf16.mxu0 0
    %314 = vmatpush2.bf16.msra.mxu0 %v274
    %315 = vmatprep.subr.bf16.mxu0 0
    %316 = vmatpush2.bf16.msra.mxu0 %v273
    %317 = vmatprep.subr.bf16.mxu0 0
    %318 = vmatpush2.bf16.msra.mxu0 %v272
    %319 = vmatprep.subr.bf16.mxu0 0
    %320 = vmatpush2.bf16.msra.mxu0 %v271
    %321 = vmatprep.subr.bf16.mxu0 0
    %322 = vmatpush2.bf16.msra.mxu0 %v270
    %323 = vmatprep.subr.bf16.mxu0 0
    %324 = vmatpush2.bf16.msra.mxu0 %v269
    %325 = vmatprep.mubr.bf16.mxu0 %v133
    %326 = vmatmul.mubr.bf16.gmra.mxu0 %v132
    %v327 = vpop.f32.mrf.mxu0
    %v328 = vadd.f32 %v195, %v327
    %v329 = vpop.f32.mrf.mxu0
    %v330 = vpop.f32.mrf.mxu0
    %v331 = vadd.f32 %v195, %v330
    %v332 = vpop.f32.mrf.mxu0
    %333 = vmatprep.mubr.bf16.mxu0 %v135
    %334 = vmatmul.mubr.bf16.gmra.mxu0 %v134
    %v335 = vpop.f32.mrf.mxu0
    %v336 = vadd.f32 %v195, %v335
    %v337 = vpop.f32.mrf.mxu0
    %v338 = vpop.f32.mrf.mxu0
    %v339 = vadd.f32 %v195, %v338
    %v340 = vpop.f32.mrf.mxu0
    %341 = vmatprep.mubr.bf16.mxu0 %v137
    %342 = vmatmul.mubr.bf16.gmra.mxu0 %v136
    %v343 = vpop.f32.mrf.mxu0
    %v344 = vadd.f32 %v195, %v343
    %v345 = vpop.f32.mrf.mxu0
    %v346 = vpop.f32.mrf.mxu0
    %v347 = vadd.f32 %v195, %v346
    %v348 = vpop.f32.mrf.mxu0
    %349 = vmatprep.mubr.bf16.mxu0 %v139
    %350 = vmatmul.mubr.bf16.gmra.mxu0 %v138
    %v351 = vpop.f32.mrf.mxu0
    %v352 = vadd.f32 %v195, %v351
    %v353 = vpop.f32.mrf.mxu0
    %v354 = vpop.f32.mrf.mxu0
    %v355 = vadd.f32 %v195, %v354
    %v356 = vpop.f32.mrf.mxu0
    %357 = vmatprep.mubr.bf16.mxu0 %v141
    %358 = vmatmul.mubr.bf16.gmra.mxu0 %v140
    %v359 = vpop.f32.mrf.mxu0
    %v360 = vadd.f32 %v195, %v359
    %v361 = vpop.f32.mrf.mxu0
    %v362 = vpop.f32.mrf.mxu0
    %v363 = vadd.f32 %v195, %v362
    %v364 = vpop.f32.mrf.mxu0
    %365 = vmatprep.mubr.bf16.mxu0 %v143
    %366 = vmatmul.mubr.bf16.gmra.mxu0 %v142
    %v367 = vpop.f32.mrf.mxu0
    %v368 = vadd.f32 %v195, %v367
    %v369 = vpop.f32.mrf.mxu0
    %v370 = vpop.f32.mrf.mxu0
    %v371 = vadd.f32 %v195, %v370
    %v372 = vpop.f32.mrf.mxu0
    %373 = vmatprep.mubr.bf16.mxu0 %v145
    %374 = vmatmul.mubr.bf16.gmra.mxu0 %v144
    %v375 = vpop.f32.mrf.mxu0
    %v376 = vadd.f32 %v195, %v375
    %v377 = vpop.f32.mrf.mxu0
    %v378 = vpop.f32.mrf.mxu0
    %v379 = vadd.f32 %v195, %v378
    %v380 = vpop.f32.mrf.mxu0
    %381 = vmatprep.mubr.bf16.mxu0 %v147
    %382 = vmatmul.mubr.bf16.gmra.mxu0 %v146
    %v383 = vpop.f32.mrf.mxu0
    %v384 = vadd.f32 %v195, %v383
    %v385 = vpop.f32.mrf.mxu0
    %v386 = vpop.f32.mrf.mxu0
    %v387 = vadd.f32 %v195, %v386
    %v388 = vpop.f32.mrf.mxu0
    %389 = vmatprep.mubr.bf16.mxu0 %v149
    %390 = vmatmul.mubr.bf16.gmra.mxu0 %v148
    %v391 = vpop.f32.mrf.mxu0
    %v392 = vadd.f32 %v195, %v391
    %v393 = vpop.f32.mrf.mxu0
    %v394 = vpop.f32.mrf.mxu0
    %v395 = vadd.f32 %v195, %v394
    %v396 = vpop.f32.mrf.mxu0
    %397 = vmatprep.mubr.bf16.mxu0 %v151
    %398 = vmatmul.mubr.bf16.gmra.mxu0 %v150
    %v399 = vpop.f32.mrf.mxu0
    %v400 = vadd.f32 %v195, %v399
    %v401 = vpop.f32.mrf.mxu0
    %v402 = vpop.f32.mrf.mxu0
    %v403 = vadd.f32 %v195, %v402
    %v404 = vpop.f32.mrf.mxu0
    %405 = vmatprep.mubr.bf16.mxu0 %v153
    %406 = vmatmul.mubr.bf16.gmra.mxu0 %v152
    %v407 = vpop.f32.mrf.mxu0
    %v408 = vadd.f32 %v195, %v407
    %v409 = vpop.f32.mrf.mxu0
    %v410 = vpop.f32.mrf.mxu0
    %v411 = vadd.f32 %v195, %v410
    %v412 = vpop.f32.mrf.mxu0
    %413 = vmatprep.mubr.bf16.mxu0 %v155
    %414 = vmatmul.mubr.bf16.gmra.mxu0 %v154
    %v415 = vpop.f32.mrf.mxu0
    %v416 = vadd.f32 %v195, %v415
    %v417 = vpop.f32.mrf.mxu0
    %v418 = vpop.f32.mrf.mxu0
    %v419 = vadd.f32 %v195, %v418
    %v420 = vpop.f32.mrf.mxu0
    %421 = vmatprep.mubr.bf16.mxu0 %v157
    %422 = vmatmul.mubr.bf16.gmra.mxu0 %v156
    %v423 = vpop.f32.mrf.mxu0
    %v424 = vadd.f32 %v195, %v423
    %v425 = vpop.f32.mrf.mxu0
    %v426 = vpop.f32.mrf.mxu0
    %v427 = vpop.f32.mrf.mxu0
    %428 = vdwg.mxu0
    %v429 = vmax.f32 %v328, 0.0
    %v430 = vmax.f32 %v331, 0.0
    %v431 = vmax.f32 %v336, 0.0
    %v432 = vmax.f32 %v339, 0.0
    %v433 = vmax.f32 %v344, 0.0
    %v434 = vmax.f32 %v347, 0.0
    %v435 = vmax.f32 %v352, 0.0
    %v436 = vmax.f32 %v355, 0.0
    %v437 = vmax.f32 %v360, 0.0
    %v438 = vmax.f32 %v363, 0.0
    %v439 = vmax.f32 %v368, 0.0
    %v440 = vmax.f32 %v371, 0.0
    %v441 = vmax.f32 %v376, 0.0
    %v442 = vmax.f32 %v379, 0.0
    %v443 = vmax.f32 %v384, 0.0
    %v444 = vmax.f32 %v387, 0.0
    %v445 = vmax.f32 %v392, 0.0
    %v446 = vmax.f32 %v395, 0.0
    %v447 = vmax.f32 %v400, 0.0
    %v448 = vmax.f32 %v403, 0.0
    %v449 = vmax.f32 %v408, 0.0
    %v450 = vmax.f32 %v411, 0.0
    %v451 = vmax.f32 %v416, 0.0
    %v452 = vmax.f32 %v419, 0.0
    %v453 = vmax.f32 %v424, 0.0
    %v454 = vpack.c.bf16 %v430, %v429
    %v455 = vpack.c.bf16 %v432, %v431
    %v456 = vpack.c.bf16 %v434, %v433
    %v457 = vpack.c.bf16 %v436, %v435
    %v458 = vpack.c.bf16 %v438, %v437
    %v459 = vpack.c.bf16 %v440, %v439
    %v460 = vpack.c.bf16 %v442, %v441
    %v461 = vpack.c.bf16 %v444, %v443
    %v462 = vpack.c.bf16 %v446, %v445
    %v463 = vpack.c.bf16 %v448, %v447
    %v464 = vpack.c.bf16 %v450, %v449
    %v465 = vpack.c.bf16 %v452, %v451
    %v466 = vpack.c.bf16 %v453, %v453
    %v467 = vld [vmem:[#allocation6] sm:$0xf]
    %v468 = vld [vmem:[#allocation6 + $0x4] sm:$0xf]
    %v469 = vld [vmem:[#allocation6 + $0x8] sm:$0xf]
    %v470 = vld [vmem:[#allocation6 + $0xc] sm:$0xf]
    %v471 = vld [vmem:[#allocation6 + $0x10] sm:$0xf]
    %v472 = vld [vmem:[#allocation6 + $0x14] sm:$0xf]
    %v473 = vld [vmem:[#allocation6 + $0x18] sm:$0xf]
    %v474 = vld [vmem:[#allocation6 + $0x1c] sm:$0xf]
    %v475 = vld [vmem:[#allocation6 + $0x20] sm:$0xf]
    %v476 = vld [vmem:[#allocation6 + $0x24] sm:$0xf]
    %v477 = vld [vmem:[#allocation6 + $0x28] sm:$0xf]
    %v478 = vld [vmem:[#allocation6 + $0x2c] sm:$0xf]
    %v479 = vld [vmem:[#allocation6 + $0x30] sm:$0xf]
    %v480 = vld [vmem:[#allocation6 + $0x34] sm:$0xf]
    %v481 = vld [vmem:[#allocation6 + $0x38] sm:$0xf]
    %v482 = vld [vmem:[#allocation6 + $0x3c] sm:$0xf]
    %v483 = vld [vmem:[%s4] sm:$0x1]
    %v485 = vlaneseq
    %v486 = vshrl.u32 %v485, 7
    %v487 = vsub.s32 0, %v486
    %v488 = vrot.slane %v483, %v487
    %v506 = vunpack.c.l.b16 %v467
    %v507 = vunpack.c.l.b16 %v468
    %v508 = vunpack.c.l.b16 %v469
    %v509 = vunpack.c.l.b16 %v470
    %v510 = vunpack.c.l.b16 %v471
    %v511 = vunpack.c.l.b16 %v472
    %v512 = vunpack.c.l.b16 %v473
    %v513 = vunpack.c.l.b16 %v474
    %v514 = vunpack.c.l.b16 %v475
    %v515 = vunpack.c.l.b16 %v476
    %v516 = vunpack.c.l.b16 %v477
    %v517 = vunpack.c.l.b16 %v478
    %v518 = vunpack.c.l.b16 %v479
    %v519 = vunpack.c.l.b16 %v480
    %v520 = vunpack.c.l.b16 %v481
    %v521 = vunpack.c.l.b16 %v482
    %v522 = vpack.c.b16 %v507, %v506
    %v523 = vpack.c.b16 %v509, %v508
    %v524 = vpack.c.b16 %v511, %v510
    %v525 = vpack.c.b16 %v513, %v512
    %v526 = vpack.c.b16 %v515, %v514
    %v527 = vpack.c.b16 %v517, %v516
    %v528 = vpack.c.b16 %v519, %v518
    %v529 = vpack.c.b16 %v521, %v520
    %538 = vmatprep.subr.bf16.mxu0 0
    %539 = vmatpush1.bf16.msra.mxu0 %v529
    %540 = vmatprep.subr.bf16.mxu0 0
    %541 = vmatpush1.bf16.msra.mxu0 %v528
    %542 = vmatprep.subr.bf16.mxu0 0
    %543 = vmatpush1.bf16.msra.mxu0 %v527
    %544 = vmatprep.subr.bf16.mxu0 0
    %545 = vmatpush1.bf16.msra.mxu0 %v526
    %546 = vmatprep.subr.bf16.mxu0 0
    %547 = vmatpush1.bf16.msra.mxu0 %v525
    %548 = vmatprep.subr.bf16.mxu0 0
    %549 = vmatpush1.bf16.msra.mxu0 %v524
    %550 = vmatprep.subr.bf16.mxu0 0
    %551 = vmatpush1.bf16.msra.mxu0 %v523
    %552 = vmatprep.subr.bf16.mxu0 0
    %553 = vmatpush1.bf16.msra.mxu0 %v522
    %554 = vmatprep.subr.bf16.mxu0 0
    %555 = vmatpush2.bf16.msra.mxu0 0
    %556 = vmatprep.subr.bf16.mxu0 0
    %557 = vmatpush2.bf16.msra.mxu0 0
    %558 = vmatprep.subr.bf16.mxu0 0
    %559 = vmatpush2.bf16.msra.mxu0 0
    %560 = vmatprep.subr.bf16.mxu0 0
    %561 = vmatpush2.bf16.msra.mxu0 0
    %562 = vmatprep.subr.bf16.mxu0 0
    %563 = vmatpush2.bf16.msra.mxu0 0
    %564 = vmatprep.subr.bf16.mxu0 0
    %565 = vmatpush2.bf16.msra.mxu0 0
    %566 = vmatprep.subr.bf16.mxu0 0
    %567 = vmatpush2.bf16.msra.mxu0 0
    %568 = vmatprep.subr.bf16.mxu0 0
    %569 = vmatpush2.bf16.msra.mxu0 0
    %570 = vmatprep.mubr.bf16.mxu0 0
    %571 = vmatmul.mubr.bf16.gmra.mxu0 %v454
    %v572 = vpop.f32.mrf.mxu0
    %v573 = vadd.f32 %v488, %v572
    %v574 = vpop.f32.mrf.mxu0
    %v575 = vpop.f32.mrf.mxu0
    %v576 = vadd.f32 %v488, %v575
    %v577 = vpop.f32.mrf.mxu0
    %578 = vmatprep.mubr.bf16.mxu0 0
    %579 = vmatmul.mubr.bf16.gmra.mxu0 %v455
    %v580 = vpop.f32.mrf.mxu0
    %v581 = vadd.f32 %v488, %v580
    %v582 = vpop.f32.mrf.mxu0
    %v583 = vpop.f32.mrf.mxu0
    %v584 = vadd.f32 %v488, %v583
    %v585 = vpop.f32.mrf.mxu0
    %586 = vmatprep.mubr.bf16.mxu0 0
    %587 = vmatmul.mubr.bf16.gmra.mxu0 %v456
    %v588 = vpop.f32.mrf.mxu0
    %v589 = vadd.f32 %v488, %v588
    %v590 = vpop.f32.mrf.mxu0
    %v591 = vpop.f32.mrf.mxu0
    %v592 = vadd.f32 %v488, %v591
    %v593 = vpop.f32.mrf.mxu0
    %594 = vmatprep.mubr.bf16.mxu0 0
    %595 = vmatmul.mubr.bf16.gmra.mxu0 %v457
    %v596 = vpop.f32.mrf.mxu0
    %v597 = vadd.f32 %v488, %v596
    %v598 = vpop.f32.mrf.mxu0
    %v599 = vpop.f32.mrf.mxu0
    %v600 = vadd.f32 %v488, %v599
    %v601 = vpop.f32.mrf.mxu0
    %602 = vmatprep.mubr.bf16.mxu0 0
    %603 = vmatmul.mubr.bf16.gmra.mxu0 %v458
    %v604 = vpop.f32.mrf.mxu0
    %v605 = vadd.f32 %v488, %v604
    %v606 = vpop.f32.mrf.mxu0
    %v607 = vpop.f32.mrf.mxu0
    %v608 = vadd.f32 %v488, %v607
    %v609 = vpop.f32.mrf.mxu0
    %610 = vmatprep.mubr.bf16.mxu0 0
    %611 = vmatmul.mubr.bf16.gmra.mxu0 %v459
    %v612 = vpop.f32.mrf.mxu0
    %v613 = vadd.f32 %v488, %v612
    %v614 = vpop.f32.mrf.mxu0
    %v615 = vpop.f32.mrf.mxu0
    %v616 = vadd.f32 %v488, %v615
    %v617 = vpop.f32.mrf.mxu0
    %618 = vmatprep.mubr.bf16.mxu0 0
    %619 = vmatmul.mubr.bf16.gmra.mxu0 %v460
    %v620 = vpop.f32.mrf.mxu0
    %v621 = vadd.f32 %v488, %v620
    %v622 = vpop.f32.mrf.mxu0
    %v623 = vpop.f32.mrf.mxu0
    %v624 = vadd.f32 %v488, %v623
    %v625 = vpop.f32.mrf.mxu0
    %626 = vmatprep.mubr.bf16.mxu0 0
    %627 = vmatmul.mubr.bf16.gmra.mxu0 %v461
    %v628 = vpop.f32.mrf.mxu0
    %v629 = vadd.f32 %v488, %v628
    %v630 = vpop.f32.mrf.mxu0
    %v631 = vpop.f32.mrf.mxu0
    %v632 = vadd.f32 %v488, %v631
    %v633 = vpop.f32.mrf.mxu0
    %634 = vmatprep.mubr.bf16.mxu0 0
    %635 = vmatmul.mubr.bf16.gmra.mxu0 %v462
    %v636 = vpop.f32.mrf.mxu0
    %v637 = vadd.f32 %v488, %v636
    %v638 = vpop.f32.mrf.mxu0
    %v639 = vpop.f32.mrf.mxu0
    %v640 = vadd.f32 %v488, %v639
    %v641 = vpop.f32.mrf.mxu0
    %642 = vmatprep.mubr.bf16.mxu0 0
    %643 = vmatmul.mubr.bf16.gmra.mxu0 %v463
    %v644 = vpop.f32.mrf.mxu0
    %v645 = vadd.f32 %v488, %v644
    %v646 = vpop.f32.mrf.mxu0
    %v647 = vpop.f32.mrf.mxu0
    %v648 = vadd.f32 %v488, %v647
    %v649 = vpop.f32.mrf.mxu0
    %650 = vmatprep.mubr.bf16.mxu0 0
    %651 = vmatmul.mubr.bf16.gmra.mxu0 %v464
    %v652 = vpop.f32.mrf.mxu0
    %v653 = vadd.f32 %v488, %v652
    %v654 = vpop.f32.mrf.mxu0
    %v655 = vpop.f32.mrf.mxu0
    %v656 = vadd.f32 %v488, %v655
    %v657 = vpop.f32.mrf.mxu0
    %658 = vmatprep.mubr.bf16.mxu0 0
    %659 = vmatmul.mubr.bf16.gmra.mxu0 %v465
    %v660 = vpop.f32.mrf.mxu0
    %v661 = vadd.f32 %v488, %v660
    %v662 = vpop.f32.mrf.mxu0
    %v663 = vpop.f32.mrf.mxu0
    %v664 = vadd.f32 %v488, %v663
    %v665 = vpop.f32.mrf.mxu0
    %666 = vmatprep.mubr.bf16.mxu0 0
    %667 = vmatmul.mubr.bf16.gmra.mxu0 %v466
    %v668 = vpop.f32.mrf.mxu0
    %v669 = vadd.f32 %v488, %v668
    %v670 = vpop.f32.mrf.mxu0
    %v671 = vpop.f32.mrf.mxu0
    %v672 = vpop.f32.mrf.mxu0
    %673 = vdwg.mxu0
    %v674 = vmax.f32 %v573, 0.0
    %v675 = vmax.f32 %v576, 0.0
    %v676 = vmax.f32 %v581, 0.0
    %v677 = vmax.f32 %v584, 0.0
    %v678 = vmax.f32 %v589, 0.0
    %v679 = vmax.f32 %v592, 0.0
    %v680 = vmax.f32 %v597, 0.0
    %v681 = vmax.f32 %v600, 0.0
    %v682 = vmax.f32 %v605, 0.0
    %v683 = vmax.f32 %v608, 0.0
    %v684 = vmax.f32 %v613, 0.0
    %v685 = vmax.f32 %v616, 0.0
    %v686 = vmax.f32 %v621, 0.0
    %v687 = vmax.f32 %v624, 0.0
    %v688 = vmax.f32 %v629, 0.0
    %v689 = vmax.f32 %v632, 0.0
    %v690 = vmax.f32 %v637, 0.0
    %v691 = vmax.f32 %v640, 0.0
    %v692 = vmax.f32 %v645, 0.0
    %v693 = vmax.f32 %v648, 0.0
    %v694 = vmax.f32 %v653, 0.0
    %v695 = vmax.f32 %v656, 0.0
    %v696 = vmax.f32 %v661, 0.0
    %v697 = vmax.f32 %v664, 0.0
    %v698 = vmax.f32 %v669, 0.0
    %v699 = vpack.c.bf16 %v675, %v674
    %v700 = vpack.c.bf16 %v677, %v676
    %v701 = vpack.c.bf16 %v679, %v678
    %v702 = vpack.c.bf16 %v681, %v680
    %v703 = vpack.c.bf16 %v683, %v682
    %v704 = vpack.c.bf16 %v685, %v684
    %v705 = vpack.c.bf16 %v687, %v686
    %v706 = vpack.c.bf16 %v689, %v688
    %v707 = vpack.c.bf16 %v691, %v690
    %v708 = vpack.c.bf16 %v693, %v692
    %v709 = vpack.c.bf16 %v695, %v694
    %v710 = vpack.c.bf16 %v697, %v696
    %v711 = vpack.c.bf16 %v698, %v698
    %v712 = vld [vmem:[#allocation7] sm:$0xf]
    %v713 = vld [vmem:[#allocation7 + $0x4] sm:$0xf]
    %v714 = vld [vmem:[#allocation7 + $0x8] sm:$0xf]
    %v715 = vld [vmem:[#allocation7 + $0xc] sm:$0xf]
    %v716 = vld [vmem:[#allocation7 + $0x10] sm:$0xf]
    %v717 = vld [vmem:[#allocation7 + $0x14] sm:$0xf]
    %v718 = vld [vmem:[#allocation7 + $0x18] sm:$0xf]
    %v719 = vld [vmem:[#allocation7 + $0x1c] sm:$0xf]
    %v720 = vld [vmem:[#allocation7 + $0x20] sm:$0xf]
    %v721 = vld [vmem:[#allocation7 + $0x24] sm:$0xf]
    %v722 = vld [vmem:[#allocation7 + $0x28] sm:$0xf]
    %v723 = vld [vmem:[#allocation7 + $0x2c] sm:$0xf]
    %v724 = vld [vmem:[#allocation7 + $0x30] sm:$0xf]
    %v725 = vld [vmem:[#allocation7 + $0x34] sm:$0xf]
    %v726 = vld [vmem:[#allocation7 + $0x38] sm:$0xf]
    %v727 = vld [vmem:[#allocation7 + $0x3c] sm:$0xf]
    %v744 = vunpack.c.l.b16 %v712
    %v745 = vunpack.c.l.b16 %v713
    %v746 = vunpack.c.l.b16 %v714
    %v747 = vunpack.c.l.b16 %v715
    %v748 = vunpack.c.l.b16 %v716
    %v749 = vunpack.c.l.b16 %v717
    %v750 = vunpack.c.l.b16 %v718
    %v751 = vunpack.c.l.b16 %v719
    %v752 = vunpack.c.l.b16 %v720
    %v753 = vunpack.c.l.b16 %v721
    %v754 = vunpack.c.l.b16 %v722
    %v755 = vunpack.c.l.b16 %v723
    %v756 = vunpack.c.l.b16 %v724
    %v757 = vunpack.c.l.b16 %v725
    %v758 = vunpack.c.l.b16 %v726
    %v759 = vunpack.c.l.b16 %v727
    %v760 = vpack.c.b16 %v745, %v744
    %v761 = vpack.c.b16 %v747, %v746
    %v762 = vpack.c.b16 %v749, %v748
    %v763 = vpack.c.b16 %v751, %v750
    %v764 = vpack.c.b16 %v753, %v752
    %v765 = vpack.c.b16 %v755, %v754
    %v766 = vpack.c.b16 %v757, %v756
    %v767 = vpack.c.b16 %v759, %v758
    %776 = vmatprep.subr.bf16.mxu0 0
    %777 = vmatpush1.bf16.msra.mxu0 %v767
    %778 = vmatprep.subr.bf16.mxu0 0
    %779 = vmatpush1.bf16.msra.mxu0 %v766
    %780 = vmatprep.subr.bf16.mxu0 0
    %781 = vmatpush1.bf16.msra.mxu0 %v765
    %782 = vmatprep.subr.bf16.mxu0 0
    %783 = vmatpush1.bf16.msra.mxu0 %v764
    %784 = vmatprep.subr.bf16.mxu0 0
    %785 = vmatpush1.bf16.msra.mxu0 %v763
    %786 = vmatprep.subr.bf16.mxu0 0
    %787 = vmatpush1.bf16.msra.mxu0 %v762
    %788 = vmatprep.subr.bf16.mxu0 0
    %789 = vmatpush1.bf16.msra.mxu0 %v761
    %790 = vmatprep.subr.bf16.mxu0 0
    %791 = vmatpush1.bf16.msra.mxu0 %v760
    %792 = vmatprep.subr.bf16.mxu0 0
    %793 = vmatpush2.bf16.msra.mxu0 0
    %794 = vmatprep.subr.bf16.mxu0 0
    %795 = vmatpush2.bf16.msra.mxu0 0
    %796 = vmatprep.subr.bf16.mxu0 0
    %797 = vmatpush2.bf16.msra.mxu0 0
    %798 = vmatprep.subr.bf16.mxu0 0
    %799 = vmatpush2.bf16.msra.mxu0 0
    %800 = vmatprep.subr.bf16.mxu0 0
    %801 = vmatpush2.bf16.msra.mxu0 0
    %802 = vmatprep.subr.bf16.mxu0 0
    %803 = vmatpush2.bf16.msra.mxu0 0
    %804 = vmatprep.subr.bf16.mxu0 0
    %805 = vmatpush2.bf16.msra.mxu0 0
    %806 = vmatprep.subr.bf16.mxu0 0
    %807 = vmatpush2.bf16.msra.mxu0 0
    %808 = vmatprep.mubr.bf16.mxu0 0
    %809 = vmatmul.mubr.bf16.gmra.mxu0 %v699
    %v810 = vpop.f32.mrf.mxu0
    %v811 = vadd.f32 0.0, %v810
    %v812 = vpop.f32.mrf.mxu0
    %v813 = vpop.f32.mrf.mxu0
    %v814 = vadd.f32 0.0, %v813
    %v815 = vpop.f32.mrf.mxu0
    %816 = vmatprep.mubr.bf16.mxu0 0
    %817 = vmatmul.mubr.bf16.gmra.mxu0 %v700
    %v818 = vpop.f32.mrf.mxu0
    %v819 = vadd.f32 0.0, %v818
    %v820 = vpop.f32.mrf.mxu0
    %v821 = vpop.f32.mrf.mxu0
    %v822 = vadd.f32 0.0, %v821
    %v823 = vpop.f32.mrf.mxu0
    %824 = vmatprep.mubr.bf16.mxu0 0
    %825 = vmatmul.mubr.bf16.gmra.mxu0 %v701
    %v826 = vpop.f32.mrf.mxu0
    %v827 = vadd.f32 0.0, %v826
    %v828 = vpop.f32.mrf.mxu0
    %v829 = vpop.f32.mrf.mxu0
    %v830 = vadd.f32 0.0, %v829
    %v831 = vpop.f32.mrf.mxu0
    %832 = vmatprep.mubr.bf16.mxu0 0
    %833 = vmatmul.mubr.bf16.gmra.mxu0 %v702
    %v834 = vpop.f32.mrf.mxu0
    %v835 = vadd.f32 0.0, %v834
    %v836 = vpop.f32.mrf.mxu0
    %v837 = vpop.f32.mrf.mxu0
    %v838 = vadd.f32 0.0, %v837
    %v839 = vpop.f32.mrf.mxu0
    %840 = vmatprep.mubr.bf16.mxu0 0
    %841 = vmatmul.mubr.bf16.gmra.mxu0 %v703
    %v842 = vpop.f32.mrf.mxu0
    %v843 = vadd.f32 0.0, %v842
    %v844 = vpop.f32.mrf.mxu0
    %v845 = vpop.f32.mrf.mxu0
    %v846 = vadd.f32 0.0, %v845
    %v847 = vpop.f32.mrf.mxu0
    %848 = vmatprep.mubr.bf16.mxu0 0
    %849 = vmatmul.mubr.bf16.gmra.mxu0 %v704
    %v850 = vpop.f32.mrf.mxu0
    %v851 = vadd.f32 0.0, %v850
    %v852 = vpop.f32.mrf.mxu0
    %v853 = vpop.f32.mrf.mxu0
    %v854 = vadd.f32 0.0, %v853
    %v855 = vpop.f32.mrf.mxu0
    %856 = vmatprep.mubr.bf16.mxu0 0
    %857 = vmatmul.mubr.bf16.gmra.mxu0 %v705
    %v858 = vpop.f32.mrf.mxu0
    %v859 = vadd.f32 0.0, %v858
    %v860 = vpop.f32.mrf.mxu0
    %v861 = vpop.f32.mrf.mxu0
    %v862 = vadd.f32 0.0, %v861
    %v863 = vpop.f32.mrf.mxu0
    %864 = vmatprep.mubr.bf16.mxu0 0
    %865 = vmatmul.mubr.bf16.gmra.mxu0 %v706
    %v866 = vpop.f32.mrf.mxu0
    %v867 = vadd.f32 0.0, %v866
    %v868 = vpop.f32.mrf.mxu0
    %v869 = vpop.f32.mrf.mxu0
    %v870 = vadd.f32 0.0, %v869
    %v871 = vpop.f32.mrf.mxu0
    %872 = vmatprep.mubr.bf16.mxu0 0
    %873 = vmatmul.mubr.bf16.gmra.mxu0 %v707
    %v874 = vpop.f32.mrf.mxu0
    %v875 = vadd.f32 0.0, %v874
    %v876 = vpop.f32.mrf.mxu0
    %v877 = vpop.f32.mrf.mxu0
    %v878 = vadd.f32 0.0, %v877
    %v879 = vpop.f32.mrf.mxu0
    %880 = vmatprep.mubr.bf16.mxu0 0
    %881 = vmatmul.mubr.bf16.gmra.mxu0 %v708
    %v882 = vpop.f32.mrf.mxu0
    %v883 = vadd.f32 0.0, %v882
    %v884 = vpop.f32.mrf.mxu0
    %v885 = vpop.f32.mrf.mxu0
    %v886 = vadd.f32 0.0, %v885
    %v887 = vpop.f32.mrf.mxu0
    %888 = vmatprep.mubr.bf16.mxu0 0
    %889 = vmatmul.mubr.bf16.gmra.mxu0 %v709
    %v890 = vpop.f32.mrf.mxu0
    %v891 = vadd.f32 0.0, %v890
    %v892 = vpop.f32.mrf.mxu0
    %v893 = vpop.f32.mrf.mxu0
    %v894 = vadd.f32 0.0, %v893
    %v895 = vpop.f32.mrf.mxu0
    %896 = vmatprep.mubr.bf16.mxu0 0
    %897 = vmatmul.mubr.bf16.gmra.mxu0 %v710
    %v898 = vpop.f32.mrf.mxu0
    %v899 = vadd.f32 0.0, %v898
    %v900 = vpop.f32.mrf.mxu0
    %v901 = vpop.f32.mrf.mxu0
    %v902 = vadd.f32 0.0, %v901
    %v903 = vpop.f32.mrf.mxu0
    %904 = vmatprep.mubr.bf16.mxu0 0
    %905 = vmatmul.mubr.bf16.gmra.mxu0 %v711
    %v906 = vpop.f32.mrf.mxu0
    %v907 = vadd.f32 0.0, %v906
    %v908 = vpop.f32.mrf.mxu0
    %v909 = vpop.f32.mrf.mxu0
    %v910 = vpop.f32.mrf.mxu0
    %911 = vdwg.mxu0
    %v912 = vld [vmem:[%s6] sm:$0x1]
    %v914 = vlaneseq
    %v915 = vshrl.u32 %v914, 7
    %v916 = vsub.s32 0, %v915
    %v917 = vrot.slane %v912, %v916
    %v919 = vadd.f32 %v811, %v917
    %v920 = vadd.f32 %v814, %v917
    %v921 = vadd.f32 %v819, %v917
    %v922 = vadd.f32 %v822, %v917
    %v923 = vadd.f32 %v827, %v917
    %v924 = vadd.f32 %v830, %v917
    %v925 = vadd.f32 %v835, %v917
    %v926 = vadd.f32 %v838, %v917
    %v927 = vadd.f32 %v843, %v917
    %v928 = vadd.f32 %v846, %v917
    %v929 = vadd.f32 %v851, %v917
    %v930 = vadd.f32 %v854, %v917
    %v931 = vadd.f32 %v859, %v917
    %v932 = vadd.f32 %v862, %v917
    %v933 = vadd.f32 %v867, %v917
    %v934 = vadd.f32 %v870, %v917
    %v935 = vadd.f32 %v875, %v917
    %v936 = vadd.f32 %v878, %v917
    %v937 = vadd.f32 %v883, %v917
    %v938 = vadd.f32 %v886, %v917
    %v939 = vadd.f32 %v891, %v917
    %v940 = vadd.f32 %v894, %v917
    %v941 = vadd.f32 %v899, %v917
    %v942 = vadd.f32 %v902, %v917
    %v943 = vadd.f32 %v907, %v917
    %vm944 = vcmask 64512
    %945 = vst.msk [vmem:[%s7] sm:$0xff] %vm944, %v919
    %946 = vst.msk [vmem:[%s7 + $0x8] sm:$0xff] %vm944, %v920
    %947 = vst.msk [vmem:[%s7 + $0x10] sm:$0xff] %vm944, %v921
    %948 = vst.msk [vmem:[%s7 + $0x18] sm:$0xff] %vm944, %v922
    %949 = vst.msk [vmem:[%s7 + $0x20] sm:$0xff] %vm944, %v923
    %950 = vst.msk [vmem:[%s7 + $0x28] sm:$0xff] %vm944, %v924
    %951 = vst.msk [vmem:[%s7 + $0x30] sm:$0xff] %vm944, %v925
    %952 = vst.msk [vmem:[%s7 + $0x38] sm:$0xff] %vm944, %v926
    %953 = vst.msk [vmem:[%s7 + $0x40] sm:$0xff] %vm944, %v927
    %954 = vst.msk [vmem:[%s7 + $0x48] sm:$0xff] %vm944, %v928
    %955 = vst.msk [vmem:[%s7 + $0x50] sm:$0xff] %vm944, %v929
    %956 = vst.msk [vmem:[%s7 + $0x58] sm:$0xff] %vm944, %v930
    %957 = vst.msk [vmem:[%s7 + $0x60] sm:$0xff] %vm944, %v931
    %958 = vst.msk [vmem:[%s7 + $0x68] sm:$0xff] %vm944, %v932
    %959 = vst.msk [vmem:[%s7 + $0x70] sm:$0xff] %vm944, %v933
    %960 = vst.msk [vmem:[%s7 + $0x78] sm:$0xff] %vm944, %v934
    %961 = vst.msk [vmem:[%s7 + $0x80] sm:$0xff] %vm944, %v935
    %962 = vst.msk [vmem:[%s7 + $0x88] sm:$0xff] %vm944, %v936
    %963 = vst.msk [vmem:[%s7 + $0x90] sm:$0xff] %vm944, %v937
    %964 = vst.msk [vmem:[%s7 + $0x98] sm:$0xff] %vm944, %v938
    %965 = vst.msk [vmem:[%s7 + $0xa0] sm:$0xff] %vm944, %v939
    %966 = vst.msk [vmem:[%s7 + $0xa8] sm:$0xff] %vm944, %v940
    %967 = vst.msk [vmem:[%s7 + $0xb0] sm:$0xff] %vm944, %v941
    %968 = vst.msk [vmem:[%s7 + $0xb8] sm:$0xff] %vm944, %v942
    %969 = vst.msk [vmem:[%s7 + $0xc0] sm:$0xff] %vm944, %v943
    // Predicated region
    $region46: #{encoder_trans_forward.1} parent=1 // pred_check
      _
    $region47: #{encoder_trans_forward.1} parent=1 // pred_check_branch
      %971 = sbr.rel (0) target = $region49
    $region48: #{encoder_trans_forward.1} parent=1 // pred_region
      _
    $region49: #{encoder_trans_forward.1} parent=1 // pred_fallthru
      _
    // Predicated region
    $region50: #{encoder_trans_forward.1} parent=1 // pred_check
      _
    $region51: #{encoder_trans_forward.1} parent=1 // pred_check_branch
      %973 = sbr.rel (0) target = $region53
    $region52: #{encoder_trans_forward.1} parent=1 // pred_region
      _
    $region53: #{encoder_trans_forward.1} parent=1 // pred_fallthru
      _
    %974 = vsyncpa [#allocation3], 1
    %975 = vsyncpa [#allocation5], 1
    %976 = vsyncpa [#allocation8], 1

</llo_original>
